<compile_context>
chip_gen: v7x
topology: tpu7x:2x2x1
jax: 0.10.0
libtpu: 0.0.40
codegen_flags: <defaults>
</compile_context>

<pallas_src>
import jax
import jax.numpy as jnp
from jax.experimental import pallas as pl
from jax.experimental.pallas import tpu as pltpu

# VMEM budgeting: keep double-buffered input/output blocks + accumulator
# scratch under ~36 MiB and request a 48 MiB scoped limit (safe on v7x).
_VMEM_BLOCK_BUDGET = 36 * 1024 * 1024
_VMEM_LIMIT_BYTES = 48 * 1024 * 1024

# Tile caps (aligned to the (8, 128) layout tile / MXU-friendly sizes).
_TM_CAP = 512     # second-minor dim of `a`/out blocks (multiple of 8)
_TN_CAP = 1024    # lane dim of the output block (multiple of 128)
_TK_CAP = 512     # contraction tile (multiple of 128, must divide D exactly)
_TB_CAP = 256     # batch elements folded per grid step


def _largest_dividing_tile(dim, cap, align):
    """Largest multiple of `align` that divides `dim` and is <= cap, else None."""
    t = (cap // align) * align
    while t >= align:
        if dim % t == 0:
            return t
        t -= align
    return None


# ----------------------------- kernel bodies ------------------------------ #

def _bmm_kernel_direct(a_ref, b_ref, o_ref):
    # a_ref: (TB, tm, D), b_ref: (TB, tn, D), o_ref: (TB, tm, tn)
    o_ref[...] = jnp.einsum(
        "bmk,bnk->bmn", a_ref[...], b_ref[...],
        preferred_element_type=jnp.float32,
    ).astype(o_ref.dtype)


def _bmm_kernel_acc(a_ref, b_ref, o_ref, acc_ref):
    # Contraction dim is tiled: accumulate in f32 scratch, store on last step.
    @pl.when(pl.program_id(3) == 0)
    def _init():
        acc_ref[...] = jnp.zeros_like(acc_ref)

    acc_ref[...] += jnp.einsum(
        "bmk,bnk->bmn", a_ref[...], b_ref[...],
        preferred_element_type=jnp.float32,
    )

    @pl.when(pl.program_id(3) == pl.num_programs(3) - 1)
    def _store():
        o_ref[...] = acc_ref[...].astype(o_ref.dtype)


def _rowdot_kernel(a_ref, b_ref, o_ref):
    # Degenerate M == N == 1 case: per-row dot product on the VPU (no MXU).
    a = a_ref[...].astype(jnp.float32)
    b = b_ref[...].astype(jnp.float32)
    o_ref[...] = jnp.sum(a * b, axis=-1, keepdims=True).astype(o_ref.dtype)


# ------------------------------- wrappers ---------------------------------- #

def _batched_rowdot(a2, b2, out_dtype):
    """(B, D) . (B, D) -> (B, 1, 1) via batched VPU reduction."""
    B, D = a2.shape
    item = jnp.dtype(a2.dtype).itemsize
    # Double-buffered inputs + (tiny) output per row of the block.
    per_row = 2 * (2 * D * item + jnp.dtype(out_dtype).itemsize)
    cap = max(128, (_VMEM_BLOCK_BUDGET // per_row) // 128 * 128)
    tb = B if B <= cap else cap   # either the full batch or a multiple of 128

    out = pl.pallas_call(
        _rowdot_kernel,
        out_shape=jax.ShapeDtypeStruct((B, 1), out_dtype),
        grid_spec=pltpu.PrefetchScalarGridSpec(
            num_scalar_prefetch=0,
            grid=(pl.cdiv(B, tb),),
            in_specs=[
                pl.BlockSpec((tb, D), lambda i: (i, 0)),
                pl.BlockSpec((tb, D), lambda i: (i, 0)),
            ],
            out_specs=pl.BlockSpec((tb, 1), lambda i: (i, 0)),
        ),
        compiler_params=pltpu.CompilerParams(
            dimension_semantics=("parallel",),
            vmem_limit_bytes=_VMEM_LIMIT_BYTES,
        ),
        cost_estimate=pl.CostEstimate(
            flops=2 * B * D,
            transcendentals=0,
            bytes_accessed=2 * B * D * item + B * jnp.dtype(out_dtype).itemsize,
        ),
    )(a2, b2)
    return out.reshape(B, 1, 1)


def _batched_matmul(a, b, out_dtype):
    """(B, M, D) x (B, N, D)^T -> (B, M, N), tiled over batch/M/N/D."""
    B, M, D = a.shape
    _, N, _ = b.shape

    # Contraction tile must divide D exactly (a ragged K block would fold
    # out-of-bounds garbage into the accumulation); batch/M/N tiles may be
    # ragged since out-of-bounds output rows/cols are simply dropped.
    tk = D if D <= _TK_CAP else (_largest_dividing_tile(D, _TK_CAP, 128) or D)
    tm = M if M <= _TM_CAP else _TM_CAP
    tn = N if N <= _TN_CAP else _TN_CAP
    k_steps = D // tk

    item = jnp.dtype(a.dtype).itemsize
    o_item = jnp.dtype(out_dtype).itemsize

    per_batch = 2 * (tm * tk * item + tn * tk * item + tm * tn * o_item)
    if k_steps > 1:
        per_batch += tm * tn * 4  # f32 accumulator scratch (not double-buffered)
    tb = max(1, min(B, _TB_CAP, _VMEM_BLOCK_BUDGET // per_batch))

    cost = pl.CostEstimate(
        flops=2 * B * M * N * D,
        transcendentals=0,
        bytes_accessed=B * (M * D * item + N * D * item + M * N * o_item),
    )
    out_shape = jax.ShapeDtypeStruct((B, M, N), out_dtype)

    if k_steps == 1:
        # Whole contraction fits in one block: no accumulator needed.
        return pl.pallas_call(
            _bmm_kernel_direct,
            out_shape=out_shape,
            grid_spec=pltpu.PrefetchScalarGridSpec(
                num_scalar_prefetch=0,
                grid=(pl.cdiv(B, tb), pl.cdiv(M, tm), pl.cdiv(N, tn)),
                in_specs=[
                    pl.BlockSpec((tb, tm, tk), lambda bi, mi, ni: (bi, mi, 0)),
                    pl.BlockSpec((tb, tn, tk), lambda bi, mi, ni: (bi, ni, 0)),
                ],
                out_specs=pl.BlockSpec(
                    (tb, tm, tn), lambda bi, mi, ni: (bi, mi, ni)),
            ),
            compiler_params=pltpu.CompilerParams(
                dimension_semantics=("parallel", "parallel", "parallel"),
                vmem_limit_bytes=_VMEM_LIMIT_BYTES,
            ),
            cost_estimate=cost,
        )(a, b)

    return pl.pallas_call(
        _bmm_kernel_acc,
        out_shape=out_shape,
        grid_spec=pltpu.PrefetchScalarGridSpec(
            num_scalar_prefetch=0,
            grid=(pl.cdiv(B, tb), pl.cdiv(M, tm), pl.cdiv(N, tn), k_steps),
            in_specs=[
                pl.BlockSpec((tb, tm, tk), lambda bi, mi, ni, ki: (bi, mi, ki)),
                pl.BlockSpec((tb, tn, tk), lambda bi, mi, ni, ki: (bi, ni, ki)),
            ],
            out_specs=pl.BlockSpec(
                (tb, tm, tn), lambda bi, mi, ni, ki: (bi, mi, ni)),
            scratch_shapes=[pltpu.VMEM((tb, tm, tn), jnp.float32)],
        ),
        compiler_params=pltpu.CompilerParams(
            dimension_semantics=("parallel", "parallel", "parallel", "arbitrary"),
            vmem_limit_bytes=_VMEM_LIMIT_BYTES,
        ),
        cost_estimate=cost,
    )(a, b)


def inner_product_similarity(a, b):
    """JAX/Pallas equivalent of InnerProductSimilarity.forward."""
    if a.ndim == 2:
        a = a[:, None, :]
    if b.ndim == 2:
        b = b[:, None, :]
    assert a.ndim == 3 and b.ndim == 3
    B, M, D = a.shape
    Bb, N, Db = b.shape
    assert B == Bb and D == Db, "batch / feature dims must match"
    # TODO(synk): integer inputs (allowed by torch.bmm) are not handled; the
    # v7x MXU has no integer path, so floating-point inputs are required.
    assert jnp.issubdtype(a.dtype, jnp.floating), "floating inputs required"
    assert jnp.issubdtype(b.dtype, jnp.floating), "floating inputs required"

    # Promote to a common dtype so the in-kernel dot_general sees one dtype.
    out_dtype = jnp.promote_types(a.dtype, b.dtype)
    a = a.astype(out_dtype)
    b = b.astype(out_dtype)

    if M == 1 and N == 1:
        # Degenerate (B,1,D) x (B,1,D): skip the MXU, use a VPU reduction.
        return _batched_rowdot(a[:, 0, :], b[:, 0, :], out_dtype)
    return _batched_matmul(a, b, out_dtype)


if __name__ == "__main__":
    key = jax.random.PRNGKey(0)
    k_a, k_b, k_a2, k_b2, k_a3, k_b3 = jax.random.split(key, 6)

    # 3-D case (single-K, batch-folded path): a=(B, M, D), b=(B, N, D)
    B, M, N, D = 2, 8, 8, 32
    a = jax.random.normal(k_a, (B, M, D), dtype=jnp.float32)
    b = jax.random.normal(k_b, (B, N, D), dtype=jnp.float32)
    out = jax.block_until_ready(inner_product_similarity(a, b))
    ref = jnp.einsum("bmd,bnd->bmn", a, b, precision=jax.lax.Precision.HIGHEST)
    assert out.shape == (B, M, N)
    assert jnp.allclose(out, ref, atol=1e-4, rtol=1e-4)

    # 2-D case: both inputs (B, D) -> (B, 1, D) -> out (B, 1, 1)  (VPU path)
    a2 = jax.random.normal(k_a2, (B, D), dtype=jnp.float32)
    b2 = jax.random.normal(k_b2, (B, D), dtype=jnp.float32)
    out2 = jax.block_until_ready(inner_product_similarity(a2, b2))
    ref2 = jnp.einsum("bd,bd->b", a2, b2,
                      precision=jax.lax.Precision.HIGHEST)[:, None, None]
    assert out2.shape == (B, 1, 1)
    assert jnp.allclose(out2, ref2, atol=1e-4, rtol=1e-4)

    # Larger D exercises the tiled-contraction (f32 accumulator) path.
    B3, M3, N3, D3 = 2, 16, 128, 1024
    a3 = jax.random.normal(k_a3, (B3, M3, D3), dtype=jnp.float32)
    b3 = jax.random.normal(k_b3, (B3, N3, D3), dtype=jnp.float32)
    out3 = jax.block_until_ready(inner_product_similarity(a3, b3))
    ref3 = jnp.einsum("bmd,bnd->bmn", a3, b3,
                      precision=jax.lax.Precision.HIGHEST)
    assert out3.shape == (B3, M3, N3)
    assert jnp.allclose(out3, ref3, atol=1e-2, rtol=1e-3)

    print("KERNEL_OK")
</pallas_src>

<mosaic_0001>
module attributes {stable_mosaic.version = 11 : i64} {
  func.func @_bmm_kernel_direct(%arg0: i32, %arg1: i32, %arg2: i32, %arg3: memref<2x8x32xf32, #tpu.memory_space<vmem>>, %arg4: memref<2x8x32xf32, #tpu.memory_space<vmem>>, %arg5: memref<2x8x8xf32, #tpu.memory_space<vmem>>) attributes {dimension_semantics = [#tpu.dimension_semantics<parallel>, #tpu.dimension_semantics<parallel>, #tpu.dimension_semantics<parallel>], iteration_bounds = array<i64: 1, 1, 1>, scalar_prefetch = 0 : i64, scratch_operands = 0 : i64, tpu.core_type = #tpu.core_type<tc>, window_params = [{transform_indices = @transform_0, window_bounds = array<i64: 2, 8, 32>}, {transform_indices = @transform_1, window_bounds = array<i64: 2, 8, 32>}, {transform_indices = @transform_2, window_bounds = array<i64: 2, 8, 8>}]} {
    %c0 = arith.constant 0 : index
    %c0_0 = arith.constant 0 : index
    %c0_1 = arith.constant 0 : index
    %0 = vector.load %arg3[%c0, %c0_0, %c0_1] : memref<2x8x32xf32, #tpu.memory_space<vmem>>, vector<2x8x32xf32>
    %c0_2 = arith.constant 0 : index
    %c0_3 = arith.constant 0 : index
    %c0_4 = arith.constant 0 : index
    %1 = vector.load %arg4[%c0_2, %c0_3, %c0_4] : memref<2x8x32xf32, #tpu.memory_space<vmem>>, vector<2x8x32xf32>
    "tpu.trace_start"() <{level = 10 : i32, message = "bmk,bnk->bmn"}> : () -> ()
    %cst = arith.constant dense<0.000000e+00> : vector<2x8x8xf32>
    %2 = tpu.matmul %0, %1, %cst {dimension_numbers = #tpu.dot_dimension_numbers<[2], [2], [1], [1], [0, 0, 0, 1, 1, 1], [0], [0]>} : vector<2x8x32xf32>, vector<2x8x32xf32>, vector<2x8x8xf32> -> vector<2x8x8xf32>
    "tpu.trace_stop"() : () -> ()
    %c0_5 = arith.constant 0 : index
    %c0_6 = arith.constant 0 : index
    %c0_7 = arith.constant 0 : index
    %3 = vector.load %arg5[%c0_5, %c0_6, %c0_7] : memref<2x8x8xf32, #tpu.memory_space<vmem>>, vector<2x8x8xf32>
    tpu.vector_store %arg5[%c0_5, %c0_6, %c0_7], %2 {strides = array<i32>} : memref<2x8x8xf32, #tpu.memory_space<vmem>>, vector<2x8x8xf32>,
    return
  }
  func.func @transform_0(%arg0: i32, %arg1: i32, %arg2: i32) -> (i32, i32, i32) {
    %c0_i32 = arith.constant 0 : i32
    %c0_i32_0 = arith.constant 0 : i32
    return %arg0, %arg1, %c0_i32 : i32, i32, i32
  }
  func.func @transform_1(%arg0: i32, %arg1: i32, %arg2: i32) -> (i32, i32, i32) {
    %c0_i32 = arith.constant 0 : i32
    %c0_i32_0 = arith.constant 0 : i32
    return %arg0, %arg2, %c0_i32 : i32, i32, i32
  }
  func.func @transform_2(%arg0: i32, %arg1: i32, %arg2: i32) -> (i32, i32, i32) {
    %c0_i32 = arith.constant 0 : i32
    return %arg0, %arg1, %arg2 : i32, i32, i32
  }
}

</mosaic_0001>

<llo_original>
// kernel: tpu_custom_call.1
$region0: #{tpu_custom_call.1}
  #allocation0 [shape = 'u32[]', space=smem, size = 0x4, offset = 0x4, fixed_abs, tag = 'smem constant byte address 0x4 - core index']
  #allocation1 [shape = 'u32[144,128]{1,0:T(1,128)}', space=vmem, size = 0x12000, scoped, tag = 'internal scratch']
  %s0 = inlined_call_operand.hbm [shape: f32[2,8,32], index: 0, kind: input, shape index: {}]
  %s1 = inlined_call_operand.hbm [shape: f32[2,8,32], index: 1, kind: input, shape index: {}]
  %s2 = inlined_call_operand.hbm [shape: f32[2,8,8], index: 2, kind: output, shape index: {}]
  %s3 = sld [smem:[#allocation0]]
  $region26: #{tpu_custom_call.1} parent=0
    _
  %s5 = ssub.s32 1, %s3
  %s6 = scalar_select 0, %s5, %s3
  $region1: #{tpu_custom_call.1} parent=0
    #allocation2 [shape = 'u8[8192]{0}', space=vmem, size = 0x2000, scoped, tag = 'input window, operand 0, single buffered']
    #allocation3 [shape = 's32[1]{0}', space=sflag, size = 0x4, scoped, tag = 'scoped memory for tpu_custom_call.1']
    #allocation4 [shape = 's32[1]{0}', space=sflag, size = 0x4, scoped, tag = 'scoped memory for tpu_custom_call.1']
    #allocation5 [shape = 'u8[8192]{0}', space=vmem, size = 0x2000, scoped, tag = 'input window, operand 1, single buffered']
    #allocation6 [shape = 's32[1]{0}', space=sflag, size = 0x4, scoped, tag = 'scoped memory for tpu_custom_call.1']
    #allocation7 [shape = 'u8[8192]{0}', space=vmem, size = 0x2000, scoped, tag = 'output window, operand 0, single buffered']
    %7 = vsyncpa [#allocation3], 0
    %8 = vsyncpa [#allocation6], 0
    %9 = vsyncpa [#allocation4], 0
    // Predicated region
    $region2: #{tpu_custom_call.1} parent=1 // pred_check
      _
    $region3: #{tpu_custom_call.1} parent=1 // pred_check_branch
      %11 = sbr.rel (0) target = $region5
    $region4: #{tpu_custom_call.1} parent=1 // pred_region
      %s13 = ssub.s32 256, 256
      %14 = vsyncadd [#allocation3], %s13
      %s15 = sshll.u32 [#allocation2], 4
      %s16 = int_to_ptr.vmem [resolvable:$true] %s15
      %21 = dma.hbm_to_vmem [thread:$0]  %s0, 256, %s16, [#allocation3], 128, 128, 8
    $region5: #{tpu_custom_call.1} parent=1 // pred_fallthru
      _
    // Predicated region
    $region6: #{tpu_custom_call.1} parent=1 // pred_check
      _
    $region7: #{tpu_custom_call.1} parent=1 // pred_check_branch
      %23 = sbr.rel (0) target = $region9
    $region8: #{tpu_custom_call.1} parent=1 // pred_region
      %s25 = ssub.s32 256, 256
      %26 = vsyncadd [#allocation6], %s25
      %s27 = sshll.u32 [#allocation5], 4
      %s28 = int_to_ptr.vmem [resolvable:$true] %s27
      %33 = dma.hbm_to_vmem [thread:$0]  %s1, 256, %s28, [#allocation6], 128, 128, 8
    $region9: #{tpu_custom_call.1} parent=1 // pred_fallthru
      _
    // Predicated region
    $region10: #{tpu_custom_call.1} parent=1 // pred_check
      _
    $region11: #{tpu_custom_call.1} parent=1 // pred_check_branch
      %35 = sbr.rel (0) target = $region13
    $region12: #{tpu_custom_call.1} parent=1 // pred_region
      %36 = dma.done [#allocation3], 256
    $region13: #{tpu_custom_call.1} parent=1 // pred_fallthru
      _
    // Predicated region
    $region14: #{tpu_custom_call.1} parent=1 // pred_check
      _
    $region15: #{tpu_custom_call.1} parent=1 // pred_check_branch
      %38 = sbr.rel (0) target = $region17
    $region16: #{tpu_custom_call.1} parent=1 // pred_region
      %39 = dma.done [#allocation6], 256
    $region17: #{tpu_custom_call.1} parent=1 // pred_fallthru
      _
    %v40 = vld [vmem:[#allocation2] sm:$0xff]
    %v41 = vld [vmem:[#allocation2 + $0x8] sm:$0xff]
    %v42 = vld [vmem:[#allocation5] sm:$0xff]
    %v43 = vld [vmem:[#allocation5 + $0x8] sm:$0xff]
    %vm44 = vcmask 261120
    %v46 = vsel %vm44, %v40, 0
    %v49 = vsel %vm44, %v42, 0
    %51 = vmatprep.subr.mxu0 0.0
    %52 = vmatpush1.xpose.msra.mxu0 %v49
    %53 = vmatprep.subr.mxu0 0.0
    %54 = vmatpush1.xpose.msra.mxu0 0.0
    %55 = vmatprep.subr.mxu0 0.0
    %56 = vmatpush1.xpose.msra.mxu0 0.0
    %57 = vmatprep.subr.mxu0 0.0
    %58 = vmatpush1.xpose.msra.mxu0 0.0
    %59 = vmatprep.subr.mxu0 0.0
    %60 = vmatpush1.xpose.msra.mxu0 0.0
    %61 = vmatprep.subr.mxu0 0.0
    %62 = vmatpush1.xpose.msra.mxu0 0.0
    %63 = vmatprep.subr.mxu0 0.0
    %64 = vmatpush1.xpose.msra.mxu0 0.0
    %65 = vmatprep.subr.mxu0 0.0
    %66 = vmatpush1.xpose.msra.mxu0 0.0
    %67 = vmatprep.subr.mxu0 0.0
    %68 = vmatpush1.xpose.msra.mxu0 0.0
    %69 = vmatprep.subr.mxu0 0.0
    %70 = vmatpush1.xpose.msra.mxu0 0.0
    %71 = vmatprep.subr.mxu0 0.0
    %72 = vmatpush1.xpose.msra.mxu0 0.0
    %73 = vmatprep.subr.mxu0 0.0
    %74 = vmatpush1.xpose.msra.mxu0 0.0
    %75 = vmatprep.subr.mxu0 0.0
    %76 = vmatpush1.xpose.msra.mxu0 0.0
    %77 = vmatprep.subr.mxu0 0.0
    %78 = vmatpush1.xpose.msra.mxu0 0.0
    %79 = vmatprep.subr.mxu0 0.0
    %80 = vmatpush1.xpose.msra.mxu0 0.0
    %81 = vmatprep.subr.mxu0 0.0
    %82 = vmatpush1.xpose.msra.mxu0 0.0
    %83 = vmatprep.subr.mxu0 0.0
    %84 = vmatpush1.xpose.msra.mxu0 0.0
    %85 = vmatprep.subr.mxu0 0.0
    %86 = vmatpush1.xpose.msra.mxu0 0.0
    %87 = vmatprep.subr.mxu0 0.0
    %88 = vmatpush1.xpose.msra.mxu0 0.0
    %89 = vmatprep.subr.mxu0 0.0
    %90 = vmatpush1.xpose.msra.mxu0 0.0
    %91 = vmatprep.subr.mxu0 0.0
    %92 = vmatpush1.xpose.msra.mxu0 0.0
    %93 = vmatprep.subr.mxu0 0.0
    %94 = vmatpush1.xpose.msra.mxu0 0.0
    %95 = vmatprep.subr.mxu0 0.0
    %96 = vmatpush1.xpose.msra.mxu0 0.0
    %97 = vmatprep.subr.mxu0 0.0
    %98 = vmatpush1.xpose.msra.mxu0 0.0
    %99 = vmatprep.subr.mxu0 0.0
    %100 = vmatpush1.xpose.msra.mxu0 0.0
    %101 = vmatprep.subr.mxu0 0.0
    %102 = vmatpush1.xpose.msra.mxu0 0.0
    %103 = vmatprep.subr.mxu0 0.0
    %104 = vmatpush1.xpose.msra.mxu0 0.0
    %105 = vmatprep.subr.mxu0 0.0
    %106 = vmatpush1.xpose.msra.mxu0 0.0
    %107 = vmatprep.subr.mxu0 0.0
    %108 = vmatpush1.xpose.msra.mxu0 0.0
    %109 = vmatprep.subr.mxu0 0.0
    %110 = vmatpush1.xpose.msra.mxu0 0.0
    %111 = vmatprep.subr.mxu0 0.0
    %112 = vmatpush1.xpose.msra.mxu0 0.0
    %113 = vmatprep.subr.mxu0 0.0
    %114 = vmatpush1.xpose.msra.mxu0 0.0
    %115 = vmatprep.mubr.f32.mxu0 0.0
    %116 = vmatmul.mubr.f32.gmra.mrb[0].mxu0 %v46
    %v117 = vpop.f32.mrb[0].mxu0
    %v118 = vadd.f32 0.0, %v117
    %v119 = vpop.f32.mrb[0].mxu0
    %120 = vdwg.mxu0
    %v122 = vsel %vm44, %v41, 0
    %v125 = vsel %vm44, %v43, 0
    %127 = vmatprep.subr.mxu0 0.0
    %128 = vmatpush1.xpose.msra.mxu0 %v125
    %129 = vmatprep.subr.mxu0 0.0
    %130 = vmatpush1.xpose.msra.mxu0 0.0
    %131 = vmatprep.subr.mxu0 0.0
    %132 = vmatpush1.xpose.msra.mxu0 0.0
    %133 = vmatprep.subr.mxu0 0.0
    %134 = vmatpush1.xpose.msra.mxu0 0.0
    %135 = vmatprep.subr.mxu0 0.0
    %136 = vmatpush1.xpose.msra.mxu0 0.0
    %137 = vmatprep.subr.mxu0 0.0
    %138 = vmatpush1.xpose.msra.mxu0 0.0
    %139 = vmatprep.subr.mxu0 0.0
    %140 = vmatpush1.xpose.msra.mxu0 0.0
    %141 = vmatprep.subr.mxu0 0.0
    %142 = vmatpush1.xpose.msra.mxu0 0.0
    %143 = vmatprep.subr.mxu0 0.0
    %144 = vmatpush1.xpose.msra.mxu0 0.0
    %145 = vmatprep.subr.mxu0 0.0
    %146 = vmatpush1.xpose.msra.mxu0 0.0
    %147 = vmatprep.subr.mxu0 0.0
    %148 = vmatpush1.xpose.msra.mxu0 0.0
    %149 = vmatprep.subr.mxu0 0.0
    %150 = vmatpush1.xpose.msra.mxu0 0.0
    %151 = vmatprep.subr.mxu0 0.0
    %152 = vmatpush1.xpose.msra.mxu0 0.0
    %153 = vmatprep.subr.mxu0 0.0
    %154 = vmatpush1.xpose.msra.mxu0 0.0
    %155 = vmatprep.subr.mxu0 0.0
    %156 = vmatpush1.xpose.msra.mxu0 0.0
    %157 = vmatprep.subr.mxu0 0.0
    %158 = vmatpush1.xpose.msra.mxu0 0.0
    %159 = vmatprep.subr.mxu0 0.0
    %160 = vmatpush1.xpose.msra.mxu0 0.0
    %161 = vmatprep.subr.mxu0 0.0
    %162 = vmatpush1.xpose.msra.mxu0 0.0
    %163 = vmatprep.subr.mxu0 0.0
    %164 = vmatpush1.xpose.msra.mxu0 0.0
    %165 = vmatprep.subr.mxu0 0.0
    %166 = vmatpush1.xpose.msra.mxu0 0.0
    %167 = vmatprep.subr.mxu0 0.0
    %168 = vmatpush1.xpose.msra.mxu0 0.0
    %169 = vmatprep.subr.mxu0 0.0
    %170 = vmatpush1.xpose.msra.mxu0 0.0
    %171 = vmatprep.subr.mxu0 0.0
    %172 = vmatpush1.xpose.msra.mxu0 0.0
    %173 = vmatprep.subr.mxu0 0.0
    %174 = vmatpush1.xpose.msra.mxu0 0.0
    %175 = vmatprep.subr.mxu0 0.0
    %176 = vmatpush1.xpose.msra.mxu0 0.0
    %177 = vmatprep.subr.mxu0 0.0
    %178 = vmatpush1.xpose.msra.mxu0 0.0
    %179 = vmatprep.subr.mxu0 0.0
    %180 = vmatpush1.xpose.msra.mxu0 0.0
    %181 = vmatprep.subr.mxu0 0.0
    %182 = vmatpush1.xpose.msra.mxu0 0.0
    %183 = vmatprep.subr.mxu0 0.0
    %184 = vmatpush1.xpose.msra.mxu0 0.0
    %185 = vmatprep.subr.mxu0 0.0
    %186 = vmatpush1.xpose.msra.mxu0 0.0
    %187 = vmatprep.subr.mxu0 0.0
    %188 = vmatpush1.xpose.msra.mxu0 0.0
    %189 = vmatprep.subr.mxu0 0.0
    %190 = vmatpush1.xpose.msra.mxu0 0.0
    %191 = vmatprep.mubr.f32.mxu0 0.0
    %192 = vmatmul.mubr.f32.gmra.mrb[0].mxu0 %v122
    %v193 = vpop.f32.mrb[0].mxu0
    %v194 = vadd.f32 0.0, %v193
    %v195 = vpop.f32.mrb[0].mxu0
    %196 = vdwg.mxu0
    %vm197 = vcmask 64512
    %198 = vst.msk [vmem:[#allocation7] sm:$0xff] %vm197, %v118
    %199 = vst.msk [vmem:[#allocation7 + $0x8] sm:$0xff] %vm197, %v194
    // Predicated region
    $region18: #{tpu_custom_call.1} parent=1 // pred_check
      _
    $region19: #{tpu_custom_call.1} parent=1 // pred_check_branch
      %201 = sbr.rel (0) target = $region21
    $region20: #{tpu_custom_call.1} parent=1 // pred_region
      %s203 = ssub.s32 256, 256
      %204 = vsyncadd [#allocation4], %s203
      %s205 = sshll.u32 [#allocation7], 4
      %s206 = int_to_ptr.vmem [resolvable:$true] %s205
      %211 = dma.vmem_to_hbm [thread:$0]  %s206, 256, %s2, [#allocation4], 128, 128, 8
    $region21: #{tpu_custom_call.1} parent=1 // pred_fallthru
      _
    // Predicated region
    $region22: #{tpu_custom_call.1} parent=1 // pred_check
      _
    $region23: #{tpu_custom_call.1} parent=1 // pred_check_branch
      %213 = sbr.rel (0) target = $region25
    $region24: #{tpu_custom_call.1} parent=1 // pred_region
      %214 = dma.done [#allocation4], 256
    $region25: #{tpu_custom_call.1} parent=1 // pred_fallthru
      _
    %215 = vsyncpa [#allocation3], 1
    %216 = vsyncpa [#allocation6], 1
    %217 = vsyncpa [#allocation4], 1

</llo_original>
